<compile_context>
chip_gen: v6e
topology: v6e:2x2x1
jax: 0.10.0
libtpu: 0.0.40
codegen_flags: <defaults>
</compile_context>

<pallas_src>
import functools

import jax
import jax.numpy as jnp
from jax.experimental import pallas as pl
from jax.experimental.pallas import tpu as pltpu


# ---------------------------------------------------------------------------
# Buffer setup (mirrors PositionalEncoding.__init__)
# ---------------------------------------------------------------------------
def build_pe_buffer(d_model: int, max_len: int = 5000,
                    dtype=jnp.float32) -> jnp.ndarray:
    """Sinusoidal positional-encoding buffer, shape [max_len, 1, d_model]."""
    position = jnp.arange(0, max_len, dtype=jnp.float32)[:, None]          # [L, 1]
    div_term = jnp.power(
        10000.0, jnp.arange(0, d_model, 2, dtype=jnp.float32) / d_model
    )                                                                        # [D/2]
    pe = jnp.zeros((max_len, d_model), dtype=jnp.float32)
    pe = pe.at[:, 0::2].set(jnp.sin(position / div_term))
    pe = pe.at[:, 1::2].set(jnp.cos(position / div_term))
    # .unsqueeze(0).transpose(0, 1) -> [max_len, 1, d_model]
    return pe[:, None, :].astype(dtype)


# ---------------------------------------------------------------------------
# Pallas kernels (elementwise hot path)
# ---------------------------------------------------------------------------
def _pe_add_kernel(x_ref, pe_ref, o_ref):
    # x_ref: [TS, B, D], pe_ref: [TS, 1, D] -> broadcast over batch.
    o_ref[...] = (x_ref[...] + pe_ref[...]).astype(o_ref.dtype)


def _pe_add_dropout_kernel(x_ref, pe_ref, m_ref, o_ref):
    # m_ref already holds keep_mask / (1 - p); single fused multiply, no extra
    # temporaries / stores (keeps the v5e store path minimal).
    o_ref[...] = ((x_ref[...] + pe_ref[...]) * m_ref[...]).astype(o_ref.dtype)


def _pick_seq_tile(seq_len: int, batch: int, d_model: int, itemsize: int,
                   target_bytes: int = 2 << 20) -> int:
    """Rows of x per tile so each x-sized VMEM tile is <= ~2 MiB.

    With double-buffered x, mask and out tiles (+ the tiny pe tile) the total
    VMEM footprint stays ~12 MiB, under the default scoped limits on
    v5e (16 MiB) and v6e/v7x (32 MiB), while keeping the DMA pipeline full.
    """
    per_row = max(1, batch * d_model * itemsize)
    rows = max(1, target_bytes // per_row)
    return int(min(seq_len, min(rows, 1024)))


# ---------------------------------------------------------------------------
# Forward: out = dropout(x + pe[:S], p)
# ---------------------------------------------------------------------------
@functools.partial(jax.jit,
                   static_argnames=("p_drop", "training", "seq_tile"))
def positional_encoding_forward(x, pe, key, *, p_drop: float = 0.1,
                                training: bool = True, seq_tile: int = None):
    """x: [S, B, D]; pe: [max_len, 1, D]; key: jax PRNG key for dropout."""
    seq_len, batch, d_model = x.shape
    assert seq_len <= pe.shape[0], "seq_len exceeds positional buffer max_len"

    pe = pe.astype(x.dtype)  # avoid mixed-precision promote + halve pe traffic

    ts = seq_tile if seq_tile is not None else _pick_seq_tile(
        seq_len, batch, d_model, jnp.dtype(x.dtype).itemsize)
    grid = (pl.cdiv(seq_len, ts),)

    # NOTE: block last two dims (B, D) equal the full array dims, so the
    # (8,128) divisibility rule is satisfied for any B/D.  For realistic
    # transformer shapes (D a multiple of 128) stores are lane-dense.
    x_spec = pl.BlockSpec((ts, batch, d_model), lambda i: (i, 0, 0))
    pe_spec = pl.BlockSpec((ts, 1, d_model), lambda i: (i, 0, 0))
    out_spec = pl.BlockSpec((ts, batch, d_model), lambda i: (i, 0, 0))
    cparams = pltpu.CompilerParams(dimension_semantics=("parallel",))
    out_shape = jax.ShapeDtypeStruct(x.shape, x.dtype)

    p = float(p_drop) if training else 0.0
    if p <= 0.0:
        return pl.pallas_call(
            _pe_add_kernel,
            out_shape=out_shape,
            grid=grid,
            in_specs=[x_spec, pe_spec],
            out_specs=out_spec,
            compiler_params=cparams,
        )(x, pe)

    if p >= 1.0:
        mult = jnp.zeros(x.shape, x.dtype)
    else:
        keep = jax.random.bernoulli(key, 1.0 - p, x.shape)
        mult = keep.astype(x.dtype) * jnp.asarray(1.0 / (1.0 - p), x.dtype)

    return pl.pallas_call(
        _pe_add_dropout_kernel,
        out_shape=out_shape,
        grid=grid,
        in_specs=[x_spec, pe_spec, x_spec],   # mask has the same tiling as x
        out_specs=out_spec,
        compiler_params=cparams,
    )(x, pe, mult)


# ---------------------------------------------------------------------------
# Demo / checks
# ---------------------------------------------------------------------------
if __name__ == "__main__":
    d_model = 32
    max_len = 5000
    seq_len = 8
    batch = 2
    p_drop = 0.1

    root = jax.random.PRNGKey(0)
    data_key, drop_key = jax.random.split(root)
    x = jax.random.normal(data_key, (seq_len, batch, d_model), dtype=jnp.float32)
    pe = build_pe_buffer(d_model, max_len)

    ref = x + pe[:seq_len]

    # --- Eval mode: dropout is identity, must match x + pe[:S] exactly. -----
    out_eval = positional_encoding_forward(x, pe, drop_key, p_drop=p_drop,
                                           training=False)
    out_eval = jax.block_until_ready(out_eval)
    assert out_eval.shape == x.shape and out_eval.dtype == x.dtype
    assert jnp.allclose(out_eval, ref, atol=1e-6, rtol=1e-6)

    # --- Training mode: deterministic mask (same key regenerated here). -----
    out_train = positional_encoding_forward(x, pe, drop_key, p_drop=p_drop,
                                            training=True)
    out_train = jax.block_until_ready(out_train)
    keep = jax.random.bernoulli(drop_key, 1.0 - p_drop, x.shape)
    ref_train = jnp.where(keep, ref / (1.0 - p_drop), jnp.zeros_like(ref))
    assert out_train.shape == x.shape
    assert jnp.allclose(out_train, ref_train, atol=1e-5, rtol=1e-5)
    assert jnp.all(jnp.isfinite(out_train))

    # --- Multi-tile grid with a partial last block (exercise tiling path). ---
    d2, s2, b2 = 128, 40, 4
    pe2 = build_pe_buffer(d2, max_len)
    x2 = jax.random.normal(jax.random.PRNGKey(1), (s2, b2, d2),
                           dtype=jnp.float32)
    out2 = positional_encoding_forward(x2, pe2, drop_key, p_drop=p_drop,
                                       training=False, seq_tile=16)
    out2 = jax.block_until_ready(out2)
    assert jnp.allclose(out2, x2 + pe2[:s2], atol=1e-6, rtol=1e-6)

    print("KERNEL_OK")
</pallas_src>

<mosaic_0001>
module attributes {stable_mosaic.version = 11 : i64} {
  func.func @_pe_add_kernel(%arg0: i32, %arg1: memref<8x2x32xf32, #tpu.memory_space<vmem>>, %arg2: memref<8x1x32xf32, #tpu.memory_space<vmem>>, %arg3: memref<8x2x32xf32, #tpu.memory_space<vmem>>) attributes {dimension_semantics = [#tpu.dimension_semantics<parallel>], iteration_bounds = array<i64: 1>, scalar_prefetch = 0 : i64, scratch_operands = 0 : i64, tpu.core_type = #tpu.core_type<tc>, window_params = [{transform_indices = @transform_0, window_bounds = array<i64: 8, 2, 32>}, {transform_indices = @transform_1, window_bounds = array<i64: 8, 1, 32>}, {transform_indices = @transform_2, window_bounds = array<i64: 8, 2, 32>}]} {
    %c0 = arith.constant 0 : index
    %c0_0 = arith.constant 0 : index
    %c0_1 = arith.constant 0 : index
    %0 = vector.load %arg1[%c0, %c0_0, %c0_1] : memref<8x2x32xf32, #tpu.memory_space<vmem>>, vector<8x2x32xf32>
    %c0_2 = arith.constant 0 : index
    %c0_3 = arith.constant 0 : index
    %c0_4 = arith.constant 0 : index
    %1 = vector.load %arg2[%c0_2, %c0_3, %c0_4] : memref<8x1x32xf32, #tpu.memory_space<vmem>>, vector<8x1x32xf32>
    %2 = vector.broadcast %1 : vector<8x1x32xf32> to vector<8x2x32xf32>
    %3 = arith.addf %0, %2 : vector<8x2x32xf32>
    %c0_5 = arith.constant 0 : index
    %c0_6 = arith.constant 0 : index
    %c0_7 = arith.constant 0 : index
    %4 = vector.load %arg3[%c0_5, %c0_6, %c0_7] : memref<8x2x32xf32, #tpu.memory_space<vmem>>, vector<8x2x32xf32>
    tpu.vector_store %arg3[%c0_5, %c0_6, %c0_7], %3 {strides = array<i32>} : memref<8x2x32xf32, #tpu.memory_space<vmem>>, vector<8x2x32xf32>,
    return
  }
  func.func @transform_0(%arg0: i32) -> (i32, i32, i32) {
    %c0_i32 = arith.constant 0 : i32
    %c0_i32_0 = arith.constant 0 : i32
    %c0_i32_1 = arith.constant 0 : i32
    return %arg0, %c0_i32, %c0_i32_0 : i32, i32, i32
  }
  func.func @transform_1(%arg0: i32) -> (i32, i32, i32) {
    %c0_i32 = arith.constant 0 : i32
    %c0_i32_0 = arith.constant 0 : i32
    %c0_i32_1 = arith.constant 0 : i32
    return %arg0, %c0_i32, %c0_i32_0 : i32, i32, i32
  }
  func.func @transform_2(%arg0: i32) -> (i32, i32, i32) {
    %c0_i32 = arith.constant 0 : i32
    %c0_i32_0 = arith.constant 0 : i32
    %c0_i32_1 = arith.constant 0 : i32
    return %arg0, %c0_i32, %c0_i32_0 : i32, i32, i32
  }
}

</mosaic_0001>

<llo_original>
// kernel: positional_encoding_forward.1
$region0: #{positional_encoding_forward.1}
  #allocation0 [shape = 'u32[]', space=smem, size = 0x4, offset = 0x4, fixed_abs, tag = 'smem constant byte address 0x4 - core index']
  #allocation1 [shape = 'u32[144,128]{1,0:T(1,128)}', space=vmem, size = 0x12000, scoped, tag = 'internal scratch']
  %s0 = inlined_call_operand.vmem [shape: f32[8,2,32], index: 0, kind: input, shape index: {}]
  %s1 = inlined_call_operand.vmem [shape: f32[5000,1,32], index: 1, kind: input, shape index: {}]
  %s2 = inlined_call_operand.hbm [shape: f32[8,2,32], index: 2, kind: output, shape index: {}]
  %s3 = sld [smem:[#allocation0]]
  $region18: #{positional_encoding_forward.1} parent=0
    _
  %s5 = ssub.s32 1, %s3
  %s6 = scalar_select 0, %s5, %s3
  $region1: #{positional_encoding_forward.1} parent=0
    #allocation2 [shape = 'u8[8192]{0}', space=vmem, size = 0x2000, scoped, tag = 'output window, operand 0, single buffered']
    #allocation3 [shape = 's32[1]{0}', space=sflag, size = 0x4, scoped, tag = 'scoped memory for positional_encoding_forward.1']
    %7 = vsyncpa [#allocation3], 0
    // Predicated region
    $region2: #{positional_encoding_forward.1} parent=1 // pred_check
      _
    $region3: #{positional_encoding_forward.1} parent=1 // pred_check_branch
      %9 = sbr.rel (0) target = $region5
    $region4: #{positional_encoding_forward.1} parent=1 // pred_region
      _
    $region5: #{positional_encoding_forward.1} parent=1 // pred_fallthru
      _
    // Predicated region
    $region6: #{positional_encoding_forward.1} parent=1 // pred_check
      _
    $region7: #{positional_encoding_forward.1} parent=1 // pred_check_branch
      %11 = sbr.rel (0) target = $region9
    $region8: #{positional_encoding_forward.1} parent=1 // pred_region
      _
    $region9: #{positional_encoding_forward.1} parent=1 // pred_fallthru
      _
    %v12 = vld [vmem:[%s0] sm:$0x3]
    %v13 = vld [vmem:[%s0 + $0x2] sm:$0x3]
    %v14 = vld [vmem:[%s0 + $0x4] sm:$0x3]
    %v15 = vld [vmem:[%s0 + $0x6] sm:$0x3]
    %v16 = vld [vmem:[%s0 + $0x8] sm:$0x3]
    %v17 = vld [vmem:[%s0 + $0xa] sm:$0x3]
    %v18 = vld [vmem:[%s0 + $0xc] sm:$0x3]
    %v19 = vld [vmem:[%s0 + $0xe] sm:$0x3]
    %v20 = vld [vmem:[%s1] sm:$0x1]
    %v21 = vld [vmem:[%s1 + $0x1] sm:$0x1]
    %v22 = vld [vmem:[%s1 + $0x2] sm:$0x1]
    %v23 = vld [vmem:[%s1 + $0x3] sm:$0x1]
    %v24 = vld [vmem:[%s1 + $0x4] sm:$0x1]
    %v25 = vld [vmem:[%s1 + $0x5] sm:$0x1]
    %v26 = vld [vmem:[%s1 + $0x6] sm:$0x1]
    %v27 = vld [vmem:[%s1 + $0x7] sm:$0x1]
    %v36 = vlaneseq
    %v37 = vshrl.u32 %v36, 7
    %v38 = vsub.s32 0, %v37
    %v39 = vrot.slane %v20, %v38
    %v40 = vlaneseq
    %v41 = vshrl.u32 %v40, 7
    %v42 = vsub.s32 0, %v41
    %v43 = vrot.slane %v21, %v42
    %v44 = vlaneseq
    %v45 = vshrl.u32 %v44, 7
    %v46 = vsub.s32 0, %v45
    %v47 = vrot.slane %v22, %v46
    %v48 = vlaneseq
    %v49 = vshrl.u32 %v48, 7
    %v50 = vsub.s32 0, %v49
    %v51 = vrot.slane %v23, %v50
    %v52 = vlaneseq
    %v53 = vshrl.u32 %v52, 7
    %v54 = vsub.s32 0, %v53
    %v55 = vrot.slane %v24, %v54
    %v56 = vlaneseq
    %v57 = vshrl.u32 %v56, 7
    %v58 = vsub.s32 0, %v57
    %v59 = vrot.slane %v25, %v58
    %v60 = vlaneseq
    %v61 = vshrl.u32 %v60, 7
    %v62 = vsub.s32 0, %v61
    %v63 = vrot.slane %v26, %v62
    %v64 = vlaneseq
    %v65 = vshrl.u32 %v64, 7
    %v66 = vsub.s32 0, %v65
    %v67 = vrot.slane %v27, %v66
    %v76 = vadd.f32 %v12, %v39
    %v77 = vadd.f32 %v13, %v43
    %v78 = vadd.f32 %v14, %v47
    %v79 = vadd.f32 %v15, %v51
    %v80 = vadd.f32 %v16, %v55
    %v81 = vadd.f32 %v17, %v59
    %v82 = vadd.f32 %v18, %v63
    %v83 = vadd.f32 %v19, %v67
    %vm84 = vcmask 254976
    %85 = vst.msk [vmem:[#allocation2] sm:$0x3] %vm84, %v76
    %86 = vst.msk [vmem:[#allocation2 + $0x2] sm:$0x3] %vm84, %v77
    %87 = vst.msk [vmem:[#allocation2 + $0x4] sm:$0x3] %vm84, %v78
    %88 = vst.msk [vmem:[#allocation2 + $0x6] sm:$0x3] %vm84, %v79
    %89 = vst.msk [vmem:[#allocation2 + $0x8] sm:$0x3] %vm84, %v80
    %90 = vst.msk [vmem:[#allocation2 + $0xa] sm:$0x3] %vm84, %v81
    %91 = vst.msk [vmem:[#allocation2 + $0xc] sm:$0x3] %vm84, %v82
    %92 = vst.msk [vmem:[#allocation2 + $0xe] sm:$0x3] %vm84, %v83
    // Predicated region
    $region10: #{positional_encoding_forward.1} parent=1 // pred_check
      _
    $region11: #{positional_encoding_forward.1} parent=1 // pred_check_branch
      %94 = sbr.rel (0) target = $region13
    $region12: #{positional_encoding_forward.1} parent=1 // pred_region
      %s96 = ssub.s32 256, 256
      %97 = vsyncadd [#allocation3], %s96
      %s98 = sshll.u32 [#allocation2], 4
      %s99 = int_to_ptr.vmem [resolvable:$true] %s98
      %104 = dma.vmem_to_hbm [thread:$0]  %s99, 256, %s2, [#allocation3], 32, 32, 2
    $region13: #{positional_encoding_forward.1} parent=1 // pred_fallthru
      _
    // Predicated region
    $region14: #{positional_encoding_forward.1} parent=1 // pred_check
      _
    $region15: #{positional_encoding_forward.1} parent=1 // pred_check_branch
      %106 = sbr.rel (0) target = $region17
    $region16: #{positional_encoding_forward.1} parent=1 // pred_region
      %107 = dma.done [#allocation3], 256
    $region17: #{positional_encoding_forward.1} parent=1 // pred_fallthru
      _
    %108 = vsyncpa [#allocation3], 1

</llo_original>
